<compile_context>
chip_gen: v7x
topology: tpu7x:2x2x1
jax: 0.10.0
libtpu: 0.0.40
codegen_flags: <defaults>
</compile_context>

<pallas_src>
import math
import functools

import jax
import jax.numpy as jnp
from jax.experimental import pallas as pl
from jax.experimental.pallas import tpu as pltpu

_LANES = 128


def _tonemap(x):
    # _tmap1: clamp(min=0); (x / (1 + x)) ** 0.454545
    x = jnp.maximum(x, 0.0)
    return (x / (1.0 + x)) ** 0.454545


def _grs_kernel(p_ref, pp_ref, pb_ref, rd_ref, out_ref, *, alpha):
    """One tile of tb*128 points.

    p_ref  : (c, tb, 128)  p-buffer features
    pp_ref : (c, tb, 128)  p-buffer, intra-patch permutation
    pb_ref : (c, tb, 128)  p-buffer, intra-batch permutation
    rd_ref : (2, tb, 128)  precomputed reference displacements
                           row 0: 0.5*sum_c (r - r_perm_patch)^2
                           row 1: 0.5*sum_c (r - r_perm_batch)^2
    out_ref: (2, tb, 128)  per-core online-logsumexp state, resident in VMEM
                           across the inner grid axis:
                           row 0 = running max  m  (per (sublane,lane) slot)
                           row 1 = running sum  s  (rescaled by exp(-m))
    """
    i = pl.program_id(1)

    @pl.when(i == 0)
    def _():
        # Every logsumexp argument set contains +a and -a, so max >= 0;
        # initialising the running max to 0 is safe (and keeps exp args <= 0).
        out_ref[...] = jnp.zeros_like(out_ref)

    # Squared distances summed over the leading channel axis -> plain VPU adds
    # of (tb, 128) slabs; no cross-lane/sublane reduction needed.
    p = p_ref[...]
    dpp = p - pp_ref[...]
    dpb = p - pb_ref[...]
    ssq_p = jnp.sum(dpp * dpp, axis=0)                    # (tb, 128)
    ssq_b = jnp.sum(dpb * dpb, axis=0)                    # (tb, 128)

    a_p = alpha * (0.5 * ssq_p - rd_ref[0])               # (tb, 128)
    a_b = alpha * (0.5 * ssq_b - rd_ref[1])               # (tb, 128)

    m_old = out_ref[0]
    s_old = out_ref[1]

    m_new = jnp.maximum(m_old, jnp.maximum(jnp.abs(a_p), jnp.abs(a_b)))

    # Four exp terms per point, all arguments <= 0 (m_new >= |a| per slot):
    # never overflows; underflow only drops terms < ~1e-38 of a sum >= 1.
    e = (jnp.exp(a_p - m_new) + jnp.exp(-a_p - m_new)
         + jnp.exp(a_b - m_new) + jnp.exp(-a_b - m_new))

    out_ref[1] = s_old * jnp.exp(m_old - m_new) + e
    out_ref[0] = m_new


def _tpu_params():
    """(ncores, max_tb, vmem_limit_bytes) chosen per chip generation."""
    try:
        kind = jax.devices()[0].device_kind.lower()
    except Exception:
        kind = ""
    if "v7" in kind:                                   # 2 TC/chip, 64 MiB VMEM/TC
        return 2, 768, 48 << 20
    if "v6" in kind:                                   # 1 TC, 128 MiB VMEM
        return 1, 512, 96 << 20
    if "v5e" in kind or "v5 lite" in kind or "v5lite" in kind:
        return 1, 256, 64 << 20                        # 1 TC, raise 16 MiB default
    if "v5" in kind or "v4" in kind:                   # v5p / v4 megacore
        return 2, 512, 64 << 20
    return 1, 256, 64 << 20                            # conservative default


def _choose_tiling(nb, ncores, max_tb):
    """Pick (tb, inner): grid=(ncores, inner), tb lane-blocks per grid step."""
    nbc = -(-nb // ncores)                   # blocks per core (ceil)
    tb = min(max_tb, ((nbc + 7) // 8) * 8)   # don't exceed (rounded-up) data size
    tb = max(8, (tb // 8) * 8)               # sublane-aligned
    inner = -(-nbc // tb)
    return tb, inner


def grs_loss(p_buffer, ref, perm_key, alpha=2):
    """Pallas implementation of GlobalRelativeSimilarityLoss.forward.

    p_buffer: (B, S, C, H, W) float32
    ref     : (B, 3, H, W)    float32
    """
    # TODO(synk): the PyTorch runtime `isfinite` check raises on host; not
    # representable as in-kernel control flow, so it is omitted here.
    b, s, c, h, w = p_buffer.shape
    shw = s * h * w
    n = b * shw

    # ---- glue: tone-map + channel-major packing ----------------------------
    # Tone-map once on the small reference (EUP hoist), before broadcast/perm.
    ref_tm = _tonemap(ref)

    p_cm = jnp.transpose(p_buffer, (2, 0, 1, 3, 4)).reshape(c, b, shw)
    r_cm = jnp.broadcast_to(
        jnp.transpose(ref_tm, (1, 0, 2, 3)).reshape(3, b, 1, h * w),
        (3, b, s, h * w)).reshape(3, b, shw)

    k1, k2 = jax.random.split(perm_key)
    idx_patch = jax.random.permutation(k1, shw)   # torch.randperm(s*h*w)
    idx_batch = jax.random.permutation(k2, n)     # torch.randperm(b*s*h*w)

    p_rows = p_cm.reshape(c, n)
    r_rows = r_cm.reshape(3, n)
    pp_rows = jnp.take(p_cm, idx_patch, axis=2).reshape(c, n)   # intra-patch
    rp_rows = jnp.take(r_cm, idx_patch, axis=2).reshape(3, n)
    pb_rows = jnp.take(p_rows, idx_batch, axis=1)               # intra-batch
    rb_rows = jnp.take(r_rows, idx_batch, axis=1)

    # Pre-reduce the reference displacements: 9 rows -> 2 rows of kernel input.
    drp = r_rows - rp_rows
    drb = r_rows - rb_rows
    rd_rows = jnp.stack([0.5 * jnp.sum(drp * drp, axis=0),
                         0.5 * jnp.sum(drb * drb, axis=0)], axis=0)  # (2, n)

    # ---- tiling -------------------------------------------------------------
    ncores, max_tb, vmem_limit = _tpu_params()
    # Cap tb so double-buffered inputs use at most ~half the scoped VMEM.
    rows_in = 3 * c + 2
    tb_budget = (vmem_limit // 2) // (rows_in * _LANES * 4 * 2)
    max_tb = max(8, min(max_tb, (tb_budget // 8) * 8))

    nb = -(-n // _LANES)
    tb, inner = _choose_tiling(nb, ncores, max_tb)
    nb_pad = ncores * inner * tb
    n_padded = nb_pad * _LANES
    n_pad = n_padded - n          # zero-padded points (disp == 0 by construction)

    def _blockify(x):
        rows = x.shape[0]
        if n_pad:
            x = jnp.concatenate([x, jnp.zeros((rows, n_pad), x.dtype)], axis=1)
        return x.reshape(rows, nb_pad, _LANES)

    p_in = _blockify(p_rows)
    pp_in = _blockify(pp_rows)
    pb_in = _blockify(pb_rows)
    rd_in = _blockify(rd_rows)

    kernel = functools.partial(_grs_kernel, alpha=float(alpha))
    in_map = lambda pc, it: (0, pc * inner + it, 0)

    parts = pl.pallas_call(
        kernel,
        out_shape=jax.ShapeDtypeStruct((2 * ncores, tb, _LANES), jnp.float32),
        grid_spec=pltpu.PrefetchScalarGridSpec(
            num_scalar_prefetch=0,
            grid=(ncores, inner),
            in_specs=[
                pl.BlockSpec((c, tb, _LANES), in_map),
                pl.BlockSpec((c, tb, _LANES), in_map),
                pl.BlockSpec((c, tb, _LANES), in_map),
                pl.BlockSpec((2, tb, _LANES), in_map),
            ],
            out_specs=pl.BlockSpec((2, tb, _LANES), lambda pc, it: (pc, 0, 0)),
        ),
        compiler_params=pltpu.CompilerParams(
            dimension_semantics=("parallel", "arbitrary"),
            vmem_limit_bytes=vmem_limit),
    )(p_in, pp_in, pb_in, rd_in)

    # ---- merge per-core / per-slot partial (m, s) logsumexp states ----------
    parts = parts.reshape(ncores, 2, tb, _LANES)
    m_parts = parts[:, 0]
    s_parts = parts[:, 1]
    m = jnp.max(m_parts)
    total = jnp.sum(s_parts * jnp.exp(m_parts - m))
    # Remove the zero-padded points (each contributes exactly 4*exp(-m)) and
    # add the single explicit zero term of the torch reference.
    total = total + (1.0 - 4.0 * n_pad) * jnp.exp(-m)
    lse = m + jnp.log(total)
    return (lse - math.log(1 + 4 * n)) / math.sqrt(alpha)


def _grs_ref(p_buffer, ref, perm_key, alpha=2):
    """Pure-JAX reference replicating the PyTorch forward (same perms)."""
    b, s, c, h, w = p_buffer.shape
    shw = s * h * w
    n = b * shw

    ref_tm = _tonemap(ref)
    ref_s = jnp.broadcast_to(ref_tm[:, None], (b, s, 3, h, w))
    r1 = jnp.transpose(ref_s, (0, 1, 3, 4, 2)).reshape(b, shw, 3)
    p1 = jnp.transpose(p_buffer, (0, 1, 3, 4, 2)).reshape(b, shw, c)

    k1, k2 = jax.random.split(perm_key)
    idx_p = jax.random.permutation(k1, shw)
    idx_b = jax.random.permutation(k2, n)

    disp_p = (0.5 * jnp.sum((p1 - p1[:, idx_p]) ** 2, axis=-1)
              - 0.5 * jnp.sum((r1 - r1[:, idx_p]) ** 2, axis=-1)).reshape(-1)

    p1f = p1.reshape(n, c)
    r1f = r1.reshape(n, 3)
    disp_b = (0.5 * jnp.sum((p1f - p1f[idx_b]) ** 2, axis=-1)
              - 0.5 * jnp.sum((r1f - r1f[idx_b]) ** 2, axis=-1))

    e = alpha * jnp.concatenate(
        [disp_p, disp_b, -disp_p, -disp_b, jnp.zeros((1,), jnp.float32)])
    out = jax.scipy.special.logsumexp(e) - math.log(1 + 4 * n)
    return out / math.sqrt(alpha)


if __name__ == "__main__":
    key = jax.random.PRNGKey(0)
    kp, kr, kperm = jax.random.split(key, 3)

    # Main case: N = B*S*H*W = 4096 (multiple of 128).
    B, S, C, H, W = 2, 8, 4, 16, 16
    p_buffer = jax.random.normal(kp, (B, S, C, H, W), dtype=jnp.float32)
    ref = jax.random.uniform(kr, (B, 3, H, W), dtype=jnp.float32,
                             minval=0.0, maxval=2.0)

    out = jax.block_until_ready(grs_loss(p_buffer, ref, kperm, alpha=2))
    expected = jax.block_until_ready(_grs_ref(p_buffer, ref, kperm, alpha=2))
    assert bool(jnp.isfinite(out)), "non-finite kernel output"
    assert abs(float(out) - float(expected)) < 1e-3 * max(1.0, abs(float(expected))), (
        float(out), float(expected))

    # Ragged case: N = 300 (not a multiple of 128) exercises the padded tail.
    B2, S2, C2, H2, W2 = 1, 3, 4, 10, 10
    p_buffer2 = jax.random.normal(kp, (B2, S2, C2, H2, W2), dtype=jnp.float32)
    ref2 = jax.random.uniform(kr, (B2, 3, H2, W2), dtype=jnp.float32,
                              minval=0.0, maxval=2.0)
    out2 = jax.block_until_ready(grs_loss(p_buffer2, ref2, kperm, alpha=2))
    expected2 = jax.block_until_ready(_grs_ref(p_buffer2, ref2, kperm, alpha=2))
    assert bool(jnp.isfinite(out2)), "non-finite kernel output (ragged)"
    assert abs(float(out2) - float(expected2)) < 1e-3 * max(1.0, abs(float(expected2))), (
        float(out2), float(expected2))

    print("KERNEL_OK")
</pallas_src>

<mosaic_0001>
module attributes {stable_mosaic.version = 11 : i64} {
  func.func @_grs_kernel(%arg0: i32, %arg1: i32, %arg2: memref<4x32x128xf32, #tpu.memory_space<vmem>>, %arg3: memref<4x32x128xf32, #tpu.memory_space<vmem>>, %arg4: memref<4x32x128xf32, #tpu.memory_space<vmem>>, %arg5: memref<2x32x128xf32, #tpu.memory_space<vmem>>, %arg6: memref<2x32x128xf32, #tpu.memory_space<vmem>>) attributes {dimension_semantics = [#tpu.dimension_semantics<parallel>, #tpu.dimension_semantics<arbitrary>], iteration_bounds = array<i64: 1, 1>, scalar_prefetch = 0 : i64, scratch_operands = 0 : i64, tpu.core_type = #tpu.core_type<tc>, window_params = [{transform_indices = @transform_0, window_bounds = array<i64: 4, 32, 128>}, {transform_indices = @transform_1, window_bounds = array<i64: 4, 32, 128>}, {transform_indices = @transform_2, window_bounds = array<i64: 4, 32, 128>}, {transform_indices = @transform_3, window_bounds = array<i64: 2, 32, 128>}, {transform_indices = @transform_4, window_bounds = array<i64: 2, 32, 128>}]} {
    %c0_i32 = arith.constant 0 : i32
    %0 = arith.cmpi eq, %arg1, %c0_i32 : i32
    %1 = arith.extui %0 : i1 to i32
    %c0_i32_0 = arith.constant 0 : i32
    %2 = arith.cmpi ne, %1, %c0_i32_0 : i32
    scf.if %2 {
      %cst_33 = arith.constant 0.000000e+00 : f32
      %59 = vector.broadcast %cst_33 : f32 to vector<2x32x128xf32>
      %c0_34 = arith.constant 0 : index
      %c0_35 = arith.constant 0 : index
      %c0_36 = arith.constant 0 : index
      %60 = vector.load %arg6[%c0_34, %c0_35, %c0_36] : memref<2x32x128xf32, #tpu.memory_space<vmem>>, vector<2x32x128xf32>
      tpu.vector_store %arg6[%c0_34, %c0_35, %c0_36], %59 {strides = array<i32>} : memref<2x32x128xf32, #tpu.memory_space<vmem>>, vector<2x32x128xf32>,
    } else {
    }
    %c0 = arith.constant 0 : index
    %c0_1 = arith.constant 0 : index
    %c0_2 = arith.constant 0 : index
    %3 = vector.load %arg2[%c0, %c0_1, %c0_2] : memref<4x32x128xf32, #tpu.memory_space<vmem>>, vector<4x32x128xf32>
    %c0_3 = arith.constant 0 : index
    %c0_4 = arith.constant 0 : index
    %c0_5 = arith.constant 0 : index
    %4 = vector.load %arg3[%c0_3, %c0_4, %c0_5] : memref<4x32x128xf32, #tpu.memory_space<vmem>>, vector<4x32x128xf32>
    %5 = arith.subf %3, %4 : vector<4x32x128xf32>
    %c0_6 = arith.constant 0 : index
    %c0_7 = arith.constant 0 : index
    %c0_8 = arith.constant 0 : index
    %6 = vector.load %arg4[%c0_6, %c0_7, %c0_8] : memref<4x32x128xf32, #tpu.memory_space<vmem>>, vector<4x32x128xf32>
    %7 = arith.subf %3, %6 : vector<4x32x128xf32>
    %8 = arith.mulf %5, %5 : vector<4x32x128xf32>
    %cst = arith.constant dense<0.000000e+00> : vector<32x128xf32>
    %9 = vector.multi_reduction <add>, %8, %cst [0] : vector<4x32x128xf32> to vector<32x128xf32>
    %10 = arith.mulf %7, %7 : vector<4x32x128xf32>
    %cst_9 = arith.constant dense<0.000000e+00> : vector<32x128xf32>
    %11 = vector.multi_reduction <add>, %10, %cst_9 [0] : vector<4x32x128xf32> to vector<32x128xf32>
    %cst_10 = arith.constant 5.000000e-01 : f32
    %12 = vector.broadcast %cst_10 : f32 to vector<32x128xf32>
    %13 = arith.mulf %12, %9 : vector<32x128xf32>
    %c0_11 = arith.constant 0 : index
    %c0_12 = arith.constant 0 : index
    %c0_13 = arith.constant 0 : index
    %14 = vector.load %arg5[%c0_11, %c0_12, %c0_13] : memref<2x32x128xf32, #tpu.memory_space<vmem>>, vector<1x32x128xf32>
    %15 = vector.shape_cast %14 : vector<1x32x128xf32> to vector<32x128xf32>
    %16 = arith.subf %13, %15 : vector<32x128xf32>
    %cst_14 = arith.constant 2.000000e+00 : f32
    %17 = vector.broadcast %cst_14 : f32 to vector<32x128xf32>
    %18 = arith.mulf %17, %16 : vector<32x128xf32>
    %cst_15 = arith.constant 5.000000e-01 : f32
    %19 = vector.broadcast %cst_15 : f32 to vector<32x128xf32>
    %20 = arith.mulf %19, %11 : vector<32x128xf32>
    %c1 = arith.constant 1 : index
    %c0_16 = arith.constant 0 : index
    %c0_17 = arith.constant 0 : index
    %21 = vector.load %arg5[%c1, %c0_16, %c0_17] : memref<2x32x128xf32, #tpu.memory_space<vmem>>, vector<1x32x128xf32>
    %22 = vector.shape_cast %21 : vector<1x32x128xf32> to vector<32x128xf32>
    %23 = arith.subf %20, %22 : vector<32x128xf32>
    %cst_18 = arith.constant 2.000000e+00 : f32
    %24 = vector.broadcast %cst_18 : f32 to vector<32x128xf32>
    %25 = arith.mulf %24, %23 : vector<32x128xf32>
    %c0_19 = arith.constant 0 : index
    %c0_20 = arith.constant 0 : index
    %c0_21 = arith.constant 0 : index
    %26 = vector.load %arg6[%c0_19, %c0_20, %c0_21] : memref<2x32x128xf32, #tpu.memory_space<vmem>>, vector<1x32x128xf32>
    %27 = vector.shape_cast %26 : vector<1x32x128xf32> to vector<32x128xf32>
    %c1_22 = arith.constant 1 : index
    %c0_23 = arith.constant 0 : index
    %c0_24 = arith.constant 0 : index
    %28 = vector.load %arg6[%c1_22, %c0_23, %c0_24] : memref<2x32x128xf32, #tpu.memory_space<vmem>>, vector<1x32x128xf32>
    %29 = vector.shape_cast %28 : vector<1x32x128xf32> to vector<32x128xf32>
    %30 = math.absf %18 : vector<32x128xf32>
    %31 = math.absf %25 : vector<32x128xf32>
    %32 = arith.maximumf %30, %31 : vector<32x128xf32>
    %33 = arith.maximumf %27, %32 : vector<32x128xf32>
    %34 = arith.subf %18, %33 : vector<32x128xf32>
    %35 = math.exp %34 : vector<32x128xf32>
    %cst_25 = arith.constant 0.000000e+00 : f32
    %36 = vector.broadcast %cst_25 : f32 to vector<32x128xf32>
    %37 = arith.subf %36, %18 : vector<32x128xf32>
    %38 = arith.subf %37, %33 : vector<32x128xf32>
    %39 = math.exp %38 : vector<32x128xf32>
    %40 = arith.addf %35, %39 : vector<32x128xf32>
    %41 = arith.subf %25, %33 : vector<32x128xf32>
    %42 = math.exp %41 : vector<32x128xf32>
    %43 = arith.addf %40, %42 : vector<32x128xf32>
    %cst_26 = arith.constant 0.000000e+00 : f32
    %44 = vector.broadcast %cst_26 : f32 to vector<32x128xf32>
    %45 = arith.subf %44, %25 : vector<32x128xf32>
    %46 = arith.subf %45, %33 : vector<32x128xf32>
    %47 = math.exp %46 : vector<32x128xf32>
    %48 = arith.addf %43, %47 : vector<32x128xf32>
    %49 = arith.subf %27, %33 : vector<32x128xf32>
    %50 = math.exp %49 : vector<32x128xf32>
    %51 = arith.mulf %29, %50 : vector<32x128xf32>
    %52 = arith.addf %51, %48 : vector<32x128xf32>
    %c1_27 = arith.constant 1 : index
    %c0_28 = arith.constant 0 : index
    %c0_29 = arith.constant 0 : index
    %53 = vector.load %arg6[%c1_27, %c0_28, %c0_29] : memref<2x32x128xf32, #tpu.memory_space<vmem>>, vector<1x32x128xf32>
    %54 = vector.shape_cast %53 : vector<1x32x128xf32> to vector<32x128xf32>
    %55 = vector.shape_cast %52 : vector<32x128xf32> to vector<1x32x128xf32>
    tpu.vector_store %arg6[%c1_27, %c0_28, %c0_29], %55 {strides = array<i32>} : memref<2x32x128xf32, #tpu.memory_space<vmem>>, vector<1x32x128xf32>,
    %c0_30 = arith.constant 0 : index
    %c0_31 = arith.constant 0 : index
    %c0_32 = arith.constant 0 : index
    %56 = vector.load %arg6[%c0_30, %c0_31, %c0_32] : memref<2x32x128xf32, #tpu.memory_space<vmem>>, vector<1x32x128xf32>
    %57 = vector.shape_cast %56 : vector<1x32x128xf32> to vector<32x128xf32>
    %58 = vector.shape_cast %33 : vector<32x128xf32> to vector<1x32x128xf32>
    tpu.vector_store %arg6[%c0_30, %c0_31, %c0_32], %58 {strides = array<i32>} : memref<2x32x128xf32, #tpu.memory_space<vmem>>, vector<1x32x128xf32>,
    return
  }
  func.func @transform_0(%arg0: i32, %arg1: i32) -> (i32, i32, i32) {
    %c1_i32 = arith.constant 1 : i32
    %0 = arith.muli %arg0, %c1_i32 : i32
    %1 = arith.addi %0, %arg1 : i32
    %c0_i32 = arith.constant 0 : i32
    %c0_i32_0 = arith.constant 0 : i32
    %c0_i32_1 = arith.constant 0 : i32
    return %c0_i32, %1, %c0_i32_0 : i32, i32, i32
  }
  func.func @transform_1(%arg0: i32, %arg1: i32) -> (i32, i32, i32) {
    %c1_i32 = arith.constant 1 : i32
    %0 = arith.muli %arg0, %c1_i32 : i32
    %1 = arith.addi %0, %arg1 : i32
    %c0_i32 = arith.constant 0 : i32
    %c0_i32_0 = arith.constant 0 : i32
    %c0_i32_1 = arith.constant 0 : i32
    return %c0_i32, %1, %c0_i32_0 : i32, i32, i32
  }
  func.func @transform_2(%arg0: i32, %arg1: i32) -> (i32, i32, i32) {
    %c1_i32 = arith.constant 1 : i32
    %0 = arith.muli %arg0, %c1_i32 : i32
    %1 = arith.addi %0, %arg1 : i32
    %c0_i32 = arith.constant 0 : i32
    %c0_i32_0 = arith.constant 0 : i32
    %c0_i32_1 = arith.constant 0 : i32
    return %c0_i32, %1, %c0_i32_0 : i32, i32, i32
  }
  func.func @transform_3(%arg0: i32, %arg1: i32) -> (i32, i32, i32) {
    %c1_i32 = arith.constant 1 : i32
    %0 = arith.muli %arg0, %c1_i32 : i32
    %1 = arith.addi %0, %arg1 : i32
    %c0_i32 = arith.constant 0 : i32
    %c0_i32_0 = arith.constant 0 : i32
    %c0_i32_1 = arith.constant 0 : i32
    return %c0_i32, %1, %c0_i32_0 : i32, i32, i32
  }
  func.func @transform_4(%arg0: i32, %arg1: i32) -> (i32, i32, i32) {
    %c0_i32 = arith.constant 0 : i32
    %c0_i32_0 = arith.constant 0 : i32
    %c0_i32_1 = arith.constant 0 : i32
    return %arg0, %c0_i32, %c0_i32_0 : i32, i32, i32
  }
}

</mosaic_0001>

<llo_original>
// kernel: tpu_custom_call.1
$region0: #{tpu_custom_call.1}
  #allocation0 [shape = 'u32[]', space=smem, size = 0x4, offset = 0x4, fixed_abs, tag = 'smem constant byte address 0x4 - core index']
  #allocation1 [shape = 'u32[144,128]{1,0:T(1,128)}', space=vmem, size = 0x12000, scoped, tag = 'internal scratch']
  %s0 = inlined_call_operand.hbm [shape: f32[4,32,128], index: 0, kind: input, shape index: {}]
  %s1 = inlined_call_operand.hbm [shape: f32[4,32,128], index: 1, kind: input, shape index: {}]
  %s2 = inlined_call_operand.hbm [shape: f32[4,32,128], index: 2, kind: input, shape index: {}]
  %s3 = inlined_call_operand.hbm [shape: f32[2,32,128], index: 3, kind: input, shape index: {}]
  %s4 = inlined_call_operand.hbm [shape: f32[2,32,128], index: 4, kind: output, shape index: {}]
  %s5 = sld [smem:[#allocation0]]
  $region46: #{tpu_custom_call.1} parent=0
    _
  %s7 = ssub.s32 1, %s5
  %s8 = scalar_select 0, %s7, %s5
  $region1: #{tpu_custom_call.1} parent=0
    #allocation2 [shape = 'u8[65536]{0}', space=vmem, size = 0x10000, scoped, tag = 'input window, operand 0, single buffered']
    #allocation3 [shape = 's32[1]{0}', space=sflag, size = 0x4, scoped, tag = 'scoped memory for tpu_custom_call.1']
    #allocation4 [shape = 's32[1]{0}', space=sflag, size = 0x4, scoped, tag = 'scoped memory for tpu_custom_call.1']
    #allocation5 [shape = 'u8[65536]{0}', space=vmem, size = 0x10000, scoped, tag = 'input window, operand 1, single buffered']
    #allocation6 [shape = 's32[1]{0}', space=sflag, size = 0x4, scoped, tag = 'scoped memory for tpu_custom_call.1']
    #allocation7 [shape = 'u8[65536]{0}', space=vmem, size = 0x10000, scoped, tag = 'input window, operand 2, single buffered']
    #allocation8 [shape = 'u8[32768]{0}', space=vmem, size = 0x8000, scoped, tag = 'input window, operand 3, single buffered']
    #allocation9 [shape = 's32[1]{0}', space=sflag, size = 0x4, scoped, tag = 'scoped memory for tpu_custom_call.1']
    #allocation10 [shape = 'u8[32768]{0}', space=vmem, size = 0x8000, scoped, tag = 'output window, operand 0, single buffered']
    %9 = vsyncpa [#allocation3], 0
    %10 = vsyncpa [#allocation6], 0
    %11 = vsyncpa [#allocation9], 0
    %12 = vsyncpa [#allocation4], 0
    // Predicated region
    $region2: #{tpu_custom_call.1} parent=1 // pred_check
      _
    $region3: #{tpu_custom_call.1} parent=1 // pred_check_branch
      %14 = sbr.rel (0) target = $region5
    $region4: #{tpu_custom_call.1} parent=1 // pred_region
      %s15 = sadd.s32 0, 0
      %s16 = smul.u32 4, %s15
      %s18 = ssub.s32 2048, 2048
      %19 = vsyncadd [#allocation3], %s18
      %s20 = smul.addr %s16, 128
      %s21 = scalar_lea.hbm %s0, %s20
      %s22 = sshll.u32 [#allocation2], 4
      %s23 = int_to_ptr.vmem [resolvable:$true] %s22
      %28 = dma.hbm_to_vmem [thread:$0]  %s21, 2048, %s23, [#allocation3], 128, 128, 8
    $region5: #{tpu_custom_call.1} parent=1 // pred_fallthru
      _
    // Predicated region
    $region6: #{tpu_custom_call.1} parent=1 // pred_check
      _
    $region7: #{tpu_custom_call.1} parent=1 // pred_check_branch
      %30 = sbr.rel (0) target = $region9
    $region8: #{tpu_custom_call.1} parent=1 // pred_region
      %s31 = sadd.s32 0, 0
      %s32 = smul.u32 4, %s31
      %s34 = ssub.s32 2048, 2048
      %35 = vsyncadd [#allocation6], %s34
      %s36 = smul.addr %s32, 128
      %s37 = scalar_lea.hbm %s1, %s36
      %s38 = sshll.u32 [#allocation5], 4
      %s39 = int_to_ptr.vmem [resolvable:$true] %s38
      %44 = dma.hbm_to_vmem [thread:$0]  %s37, 2048, %s39, [#allocation6], 128, 128, 8
    $region9: #{tpu_custom_call.1} parent=1 // pred_fallthru
      _
    // Predicated region
    $region10: #{tpu_custom_call.1} parent=1 // pred_check
      _
    $region11: #{tpu_custom_call.1} parent=1 // pred_check_branch
      %46 = sbr.rel (0) target = $region13
    $region12: #{tpu_custom_call.1} parent=1 // pred_region
      %s47 = sadd.s32 0, 0
      %s48 = smul.u32 4, %s47
      %s50 = ssub.s32 2048, 2048
      %51 = vsyncadd [#allocation6], %s50
      %s52 = smul.addr %s48, 128
      %s53 = scalar_lea.hbm %s2, %s52
      %s54 = sshll.u32 [#allocation7], 4
      %s55 = int_to_ptr.vmem [resolvable:$true] %s54
      %60 = dma.hbm_to_vmem [thread:$0]  %s53, 2048, %s55, [#allocation6], 128, 128, 8
    $region13: #{tpu_custom_call.1} parent=1 // pred_fallthru
      _
    // Predicated region
    $region14: #{tpu_custom_call.1} parent=1 // pred_check
      _
    $region15: #{tpu_custom_call.1} parent=1 // pred_check_branch
      %62 = sbr.rel (0) target = $region17
    $region16: #{tpu_custom_call.1} parent=1 // pred_region
      %s63 = sadd.s32 0, 0
      %s64 = smul.u32 4, %s63
      %s66 = ssub.s32 1024, 1024
      %67 = vsyncadd [#allocation9], %s66
      %s68 = smul.addr %s64, 128
      %s69 = scalar_lea.hbm %s3, %s68
      %s70 = sshll.u32 [#allocation8], 4
      %s71 = int_to_ptr.vmem [resolvable:$true] %s70
      %76 = dma.hbm_to_vmem [thread:$0]  %s69, 1024, %s71, [#allocation9], 128, 128, 8
    $region17: #{tpu_custom_call.1} parent=1 // pred_fallthru
      _
    // Predicated region
    $region18: #{tpu_custom_call.1} parent=1 // pred_check
      _
    $region19: #{tpu_custom_call.1} parent=1 // pred_check_branch
      %78 = sbr.rel (0) target = $region21
    $region20: #{tpu_custom_call.1} parent=1 // pred_region
      %79 = dma.done [#allocation3], 2048
    $region21: #{tpu_custom_call.1} parent=1 // pred_fallthru
      _
    // Predicated region
    $region22: #{tpu_custom_call.1} parent=1 // pred_check
      _
    $region23: #{tpu_custom_call.1} parent=1 // pred_check_branch
      %81 = sbr.rel (0) target = $region25
    $region24: #{tpu_custom_call.1} parent=1 // pred_region
      %82 = dma.done [#allocation6], 2048
    $region25: #{tpu_custom_call.1} parent=1 // pred_fallthru
      _
    // Predicated region
    $region26: #{tpu_custom_call.1} parent=1 // pred_check
      _
    $region27: #{tpu_custom_call.1} parent=1 // pred_check_branch
      %84 = sbr.rel (0) target = $region29
    $region28: #{tpu_custom_call.1} parent=1 // pred_region
      %85 = dma.done [#allocation6], 2048
    $region29: #{tpu_custom_call.1} parent=1 // pred_fallthru
      _
    // Predicated region
    $region30: #{tpu_custom_call.1} parent=1 // pred_check
      _
    $region31: #{tpu_custom_call.1} parent=1 // pred_check_branch
      %87 = sbr.rel (0) target = $region33
    $region32: #{tpu_custom_call.1} parent=1 // pred_region
      %88 = dma.done [#allocation9], 1024
    $region33: #{tpu_custom_call.1} parent=1 // pred_fallthru
      _
    %s89 = sadd.s32 0, 0
    %s90 = smul.u32 4, %s89
    %s91 = sadd.s32 0, 0
    %s92 = smul.u32 4, %s91
    %s93 = sadd.s32 0, 0
    %s94 = smul.u32 4, %s93
    %s95 = sadd.s32 0, 0
    %s96 = smul.u32 4, %s95
    %p97 = scmp.eq.s32.totalorder 0, 0
    // Predicated region
    $region34: #{tpu_custom_call.1} parent=1 // pred_check
      %p98 = pneg %p97
    $region35: #{tpu_custom_call.1} parent=1 // pred_check_branch
      %100 = sbr.rel (%p98) target = $region37
    $region36: #{tpu_custom_call.1} parent=1 // pred_region
      %101 = vst [vmem:[#allocation10] sm:$0xff] 0.0
      %102 = vst [vmem:[#allocation10 + $0x8] sm:$0xff] 0.0
      %103 = vst [vmem:[#allocation10 + $0x10] sm:$0xff] 0.0
      %104 = vst [vmem:[#allocation10 + $0x18] sm:$0xff] 0.0
      %105 = vst [vmem:[#allocation10 + $0x20] sm:$0xff] 0.0
      %106 = vst [vmem:[#allocation10 + $0x28] sm:$0xff] 0.0
      %107 = vst [vmem:[#allocation10 + $0x30] sm:$0xff] 0.0
      %108 = vst [vmem:[#allocation10 + $0x38] sm:$0xff] 0.0
    $region37: #{tpu_custom_call.1} parent=1 // pred_fallthru
      _
    %v109 = vld [vmem:[#allocation2] sm:$0xff]
    %v110 = vld [vmem:[#allocation2 + $0x8] sm:$0xff]
    %v111 = vld [vmem:[#allocation2 + $0x10] sm:$0xff]
    %v112 = vld [vmem:[#allocation2 + $0x18] sm:$0xff]
    %v113 = vld [vmem:[#allocation2 + $0x20] sm:$0xff]
    %v114 = vld [vmem:[#allocation2 + $0x28] sm:$0xff]
    %v115 = vld [vmem:[#allocation2 + $0x30] sm:$0xff]
    %v116 = vld [vmem:[#allocation2 + $0x38] sm:$0xff]
    %v117 = vld [vmem:[#allocation2 + $0x40] sm:$0xff]
    %v118 = vld [vmem:[#allocation2 + $0x48] sm:$0xff]
    %v119 = vld [vmem:[#allocation2 + $0x50] sm:$0xff]
    %v120 = vld [vmem:[#allocation2 + $0x58] sm:$0xff]
    %v121 = vld [vmem:[#allocation2 + $0x60] sm:$0xff]
    %v122 = vld [vmem:[#allocation2 + $0x68] sm:$0xff]
    %v123 = vld [vmem:[#allocation2 + $0x70] sm:$0xff]
    %v124 = vld [vmem:[#allocation2 + $0x78] sm:$0xff]
    %v125 = vld [vmem:[#allocation5] sm:$0xff]
    %v126 = vld [vmem:[#allocation5 + $0x8] sm:$0xff]
    %v127 = vld [vmem:[#allocation5 + $0x10] sm:$0xff]
    %v128 = vld [vmem:[#allocation5 + $0x18] sm:$0xff]
    %v129 = vld [vmem:[#allocation5 + $0x20] sm:$0xff]
    %v130 = vld [vmem:[#allocation5 + $0x28] sm:$0xff]
    %v131 = vld [vmem:[#allocation5 + $0x30] sm:$0xff]
    %v132 = vld [vmem:[#allocation5 + $0x38] sm:$0xff]
    %v133 = vld [vmem:[#allocation5 + $0x40] sm:$0xff]
    %v134 = vld [vmem:[#allocation5 + $0x48] sm:$0xff]
    %v135 = vld [vmem:[#allocation5 + $0x50] sm:$0xff]
    %v136 = vld [vmem:[#allocation5 + $0x58] sm:$0xff]
    %v137 = vld [vmem:[#allocation5 + $0x60] sm:$0xff]
    %v138 = vld [vmem:[#allocation5 + $0x68] sm:$0xff]
    %v139 = vld [vmem:[#allocation5 + $0x70] sm:$0xff]
    %v140 = vld [vmem:[#allocation5 + $0x78] sm:$0xff]
    %v141 = vsub.f32 %v109, %v125
    %v142 = vsub.f32 %v110, %v126
    %v143 = vsub.f32 %v111, %v127
    %v144 = vsub.f32 %v112, %v128
    %v145 = vsub.f32 %v113, %v129
    %v146 = vsub.f32 %v114, %v130
    %v147 = vsub.f32 %v115, %v131
    %v148 = vsub.f32 %v116, %v132
    %v149 = vsub.f32 %v117, %v133
    %v150 = vsub.f32 %v118, %v134
    %v151 = vsub.f32 %v119, %v135
    %v152 = vsub.f32 %v120, %v136
    %v153 = vsub.f32 %v121, %v137
    %v154 = vsub.f32 %v122, %v138
    %v155 = vsub.f32 %v123, %v139
    %v156 = vsub.f32 %v124, %v140
    %v157 = vld [vmem:[#allocation7] sm:$0xff]
    %v158 = vld [vmem:[#allocation7 + $0x8] sm:$0xff]
    %v159 = vld [vmem:[#allocation7 + $0x10] sm:$0xff]
    %v160 = vld [vmem:[#allocation7 + $0x18] sm:$0xff]
    %v161 = vld [vmem:[#allocation7 + $0x20] sm:$0xff]
    %v162 = vld [vmem:[#allocation7 + $0x28] sm:$0xff]
    %v163 = vld [vmem:[#allocation7 + $0x30] sm:$0xff]
    %v164 = vld [vmem:[#allocation7 + $0x38] sm:$0xff]
    %v165 = vld [vmem:[#allocation7 + $0x40] sm:$0xff]
    %v166 = vld [vmem:[#allocation7 + $0x48] sm:$0xff]
    %v167 = vld [vmem:[#allocation7 + $0x50] sm:$0xff]
    %v168 = vld [vmem:[#allocation7 + $0x58] sm:$0xff]
    %v169 = vld [vmem:[#allocation7 + $0x60] sm:$0xff]
    %v170 = vld [vmem:[#allocation7 + $0x68] sm:$0xff]
    %v171 = vld [vmem:[#allocation7 + $0x70] sm:$0xff]
    %v172 = vld [vmem:[#allocation7 + $0x78] sm:$0xff]
    %v173 = vsub.f32 %v109, %v157
    %v174 = vsub.f32 %v110, %v158
    %v175 = vsub.f32 %v111, %v159
    %v176 = vsub.f32 %v112, %v160
    %v177 = vsub.f32 %v113, %v161
    %v178 = vsub.f32 %v114, %v162
    %v179 = vsub.f32 %v115, %v163
    %v180 = vsub.f32 %v116, %v164
    %v181 = vsub.f32 %v117, %v165
    %v182 = vsub.f32 %v118, %v166
    %v183 = vsub.f32 %v119, %v167
    %v184 = vsub.f32 %v120, %v168
    %v185 = vsub.f32 %v121, %v169
    %v186 = vsub.f32 %v122, %v170
    %v187 = vsub.f32 %v123, %v171
    %v188 = vsub.f32 %v124, %v172
    %v189 = vmul.f32 %v141, %v141
    %v190 = vmul.f32 %v142, %v142
    %v191 = vmul.f32 %v143, %v143
    %v192 = vmul.f32 %v144, %v144
    %v193 = vmul.f32 %v145, %v145
    %v194 = vmul.f32 %v146, %v146
    %v195 = vmul.f32 %v147, %v147
    %v196 = vmul.f32 %v148, %v148
    %v197 = vmul.f32 %v149, %v149
    %v198 = vmul.f32 %v150, %v150
    %v199 = vmul.f32 %v151, %v151
    %v200 = vmul.f32 %v152, %v152
    %v201 = vmul.f32 %v153, %v153
    %v202 = vmul.f32 %v154, %v154
    %v203 = vmul.f32 %v155, %v155
    %v204 = vmul.f32 %v156, %v156
    %v205 = vadd.f32 %v189, %v193
    %v206 = vadd.f32 %v205, %v197
    %v207 = vadd.f32 %v206, %v201
    %v208 = vadd.f32 %v190, %v194
    %v209 = vadd.f32 %v208, %v198
    %v210 = vadd.f32 %v209, %v202
    %v211 = vadd.f32 %v191, %v195
    %v212 = vadd.f32 %v211, %v199
    %v213 = vadd.f32 %v212, %v203
    %v214 = vadd.f32 %v192, %v196
    %v215 = vadd.f32 %v214, %v200
    %v216 = vadd.f32 %v215, %v204
    %v217 = vmul.f32 %v173, %v173
    %v218 = vmul.f32 %v174, %v174
    %v219 = vmul.f32 %v175, %v175
    %v220 = vmul.f32 %v176, %v176
    %v221 = vmul.f32 %v177, %v177
    %v222 = vmul.f32 %v178, %v178
    %v223 = vmul.f32 %v179, %v179
    %v224 = vmul.f32 %v180, %v180
    %v225 = vmul.f32 %v181, %v181
    %v226 = vmul.f32 %v182, %v182
    %v227 = vmul.f32 %v183, %v183
    %v228 = vmul.f32 %v184, %v184
    %v229 = vmul.f32 %v185, %v185
    %v230 = vmul.f32 %v186, %v186
    %v231 = vmul.f32 %v187, %v187
    %v232 = vmul.f32 %v188, %v188
    %v233 = vadd.f32 %v217, %v221
    %v234 = vadd.f32 %v233, %v225
    %v235 = vadd.f32 %v234, %v229
    %v236 = vadd.f32 %v218, %v222
    %v237 = vadd.f32 %v236, %v226
    %v238 = vadd.f32 %v237, %v230
    %v239 = vadd.f32 %v219, %v223
    %v240 = vadd.f32 %v239, %v227
    %v241 = vadd.f32 %v240, %v231
    %v242 = vadd.f32 %v220, %v224
    %v243 = vadd.f32 %v242, %v228
    %v244 = vadd.f32 %v243, %v232
    %v245 = vmul.f32 %v207, 0.5
    %v246 = vmul.f32 %v210, 0.5
    %v247 = vmul.f32 %v213, 0.5
    %v248 = vmul.f32 %v216, 0.5
    %v249 = vld [vmem:[#allocation8] sm:$0xff]
    %v250 = vld [vmem:[#allocation8 + $0x8] sm:$0xff]
    %v251 = vld [vmem:[#allocation8 + $0x10] sm:$0xff]
    %v252 = vld [vmem:[#allocation8 + $0x18] sm:$0xff]
    %v253 = vsub.f32 %v245, %v249
    %v254 = vsub.f32 %v246, %v250
    %v255 = vsub.f32 %v247, %v251
    %v256 = vsub.f32 %v248, %v252
    %v257 = vmul.f32 %v253, 2.0
    %v258 = vmul.f32 %v254, 2.0
    %v259 = vmul.f32 %v255, 2.0
    %v260 = vmul.f32 %v256, 2.0
    %v261 = vmul.f32 %v235, 0.5
    %v262 = vmul.f32 %v238, 0.5
    %v263 = vmul.f32 %v241, 0.5
    %v264 = vmul.f32 %v244, 0.5
    %s265 = scalar_lea.vmem [#allocation8], 32
    %v266 = vld [vmem:[%s265] sm:$0xff]
    %v267 = vld [vmem:[%s265 + $0x8] sm:$0xff]
    %v268 = vld [vmem:[%s265 + $0x10] sm:$0xff]
    %v269 = vld [vmem:[%s265 + $0x18] sm:$0xff]
    %v270 = vsub.f32 %v261, %v266
    %v271 = vsub.f32 %v262, %v267
    %v272 = vsub.f32 %v263, %v268
    %v273 = vsub.f32 %v264, %v269
    %v274 = vmul.f32 %v270, 2.0
    %v275 = vmul.f32 %v271, 2.0
    %v276 = vmul.f32 %v272, 2.0
    %v277 = vmul.f32 %v273, 2.0
    %v278 = vld [vmem:[#allocation10] sm:$0xff]
    %v279 = vld [vmem:[#allocation10 + $0x8] sm:$0xff]
    %v280 = vld [vmem:[#allocation10 + $0x10] sm:$0xff]
    %v281 = vld [vmem:[#allocation10 + $0x18] sm:$0xff]
    %s282 = scalar_lea.vmem [#allocation10], 32
    %v283 = vld [vmem:[%s282] sm:$0xff]
    %v284 = vld [vmem:[%s282 + $0x8] sm:$0xff]
    %v285 = vld [vmem:[%s282 + $0x10] sm:$0xff]
    %v286 = vld [vmem:[%s282 + $0x18] sm:$0xff]
    %v287 = vand.u32 2147483647, %v257
    %v288 = vand.u32 2147483647, %v258
    %v289 = vand.u32 2147483647, %v259
    %v290 = vand.u32 2147483647, %v260
    %v291 = vand.u32 2147483647, %v274
    %v292 = vand.u32 2147483647, %v275
    %v293 = vand.u32 2147483647, %v276
    %v294 = vand.u32 2147483647, %v277
    %v295 = vmax.f32 %v287, %v291
    %v296 = vmax.f32 %v288, %v292
    %v297 = vmax.f32 %v289, %v293
    %v298 = vmax.f32 %v290, %v294
    %v299 = vmax.f32 %v278, %v295
    %v300 = vmax.f32 %v279, %v296
    %v301 = vmax.f32 %v280, %v297
    %v302 = vmax.f32 %v281, %v298
    %v303 = vsub.f32 %v257, %v299
    %v304 = vsub.f32 %v258, %v300
    %v305 = vsub.f32 %v259, %v301
    %v306 = vsub.f32 %v260, %v302
    %v307 = vmul.f32 %v303, 1.442695
    %v308 = vpow.pop %v307
    %v309 = vmul.f32 %v304, 1.442695
    %v310 = vpow.pop %v309
    %v311 = vmul.f32 %v305, 1.442695
    %v312 = vpow.pop %v311
    %v313 = vmul.f32 %v306, 1.442695
    %v314 = vpow.pop %v313
    %v315 = vsub.f32 0.0, %v257
    %v316 = vsub.f32 0.0, %v258
    %v317 = vsub.f32 0.0, %v259
    %v318 = vsub.f32 0.0, %v260
    %v319 = vsub.f32 %v315, %v299
    %v320 = vsub.f32 %v316, %v300
    %v321 = vsub.f32 %v317, %v301
    %v322 = vsub.f32 %v318, %v302
    %v323 = vmul.f32 %v319, 1.442695
    %v324 = vpow.pop %v323
    %v325 = vmul.f32 %v320, 1.442695
    %v326 = vpow.pop %v325
    %v327 = vmul.f32 %v321, 1.442695
    %v328 = vpow.pop %v327
    %v329 = vmul.f32 %v322, 1.442695
    %v330 = vpow.pop %v329
    %v331 = vadd.f32 %v308, %v324
    %v332 = vadd.f32 %v310, %v326
    %v333 = vadd.f32 %v312, %v328
    %v334 = vadd.f32 %v314, %v330
    %v335 = vsub.f32 %v274, %v299
    %v336 = vsub.f32 %v275, %v300
    %v337 = vsub.f32 %v276, %v301
    %v338 = vsub.f32 %v277, %v302
    %v339 = vmul.f32 %v335, 1.442695
    %v340 = vpow.pop %v339
    %v341 = vmul.f32 %v336, 1.442695
    %v342 = vpow.pop %v341
    %v343 = vmul.f32 %v337, 1.442695
    %v344 = vpow.pop %v343
    %v345 = vmul.f32 %v338, 1.442695
    %v346 = vpow.pop %v345
    %v347 = vadd.f32 %v331, %v340
    %v348 = vadd.f32 %v332, %v342
    %v349 = vadd.f32 %v333, %v344
    %v350 = vadd.f32 %v334, %v346
    %v351 = vsub.f32 0.0, %v274
    %v352 = vsub.f32 0.0, %v275
    %v353 = vsub.f32 0.0, %v276
    %v354 = vsub.f32 0.0, %v277
    %v355 = vsub.f32 %v351, %v299
    %v356 = vsub.f32 %v352, %v300
    %v357 = vsub.f32 %v353, %v301
    %v358 = vsub.f32 %v354, %v302
    %v359 = vmul.f32 %v355, 1.442695
    %v360 = vpow.pop %v359
    %v361 = vmul.f32 %v356, 1.442695
    %v362 = vpow.pop %v361
    %v363 = vmul.f32 %v357, 1.442695
    %v364 = vpow.pop %v363
    %v365 = vmul.f32 %v358, 1.442695
    %v366 = vpow.pop %v365
    %v367 = vadd.f32 %v347, %v360
    %v368 = vadd.f32 %v348, %v362
    %v369 = vadd.f32 %v349, %v364
    %v370 = vadd.f32 %v350, %v366
    %v371 = vsub.f32 %v278, %v299
    %v372 = vsub.f32 %v279, %v300
    %v373 = vsub.f32 %v280, %v301
    %v374 = vsub.f32 %v281, %v302
    %v375 = vmul.f32 %v371, 1.442695
    %v376 = vpow.pop %v375
    %v377 = vmul.f32 %v372, 1.442695
    %v378 = vpow.pop %v377
    %v379 = vmul.f32 %v373, 1.442695
    %v380 = vpow.pop %v379
    %v381 = vmul.f32 %v374, 1.442695
    %v382 = vpow.pop %v381
    %v383 = vmul.f32 %v283, %v376
    %v384 = vmul.f32 %v284, %v378
    %v385 = vmul.f32 %v285, %v380
    %v386 = vmul.f32 %v286, %v382
    %v387 = vadd.f32 %v383, %v367
    %v388 = vadd.f32 %v384, %v368
    %v389 = vadd.f32 %v385, %v369
    %v390 = vadd.f32 %v386, %v370
    %391 = vst [vmem:[%s282] sm:$0xff] %v387
    %392 = vst [vmem:[%s282 + $0x8] sm:$0xff] %v388
    %393 = vst [vmem:[%s282 + $0x10] sm:$0xff] %v389
    %394 = vst [vmem:[%s282 + $0x18] sm:$0xff] %v390
    %395 = vst [vmem:[#allocation10] sm:$0xff] %v299
    %396 = vst [vmem:[#allocation10 + $0x8] sm:$0xff] %v300
    %397 = vst [vmem:[#allocation10 + $0x10] sm:$0xff] %v301
    %398 = vst [vmem:[#allocation10 + $0x18] sm:$0xff] %v302
    // Predicated region
    $region38: #{tpu_custom_call.1} parent=1 // pred_check
      _
    $region39: #{tpu_custom_call.1} parent=1 // pred_check_branch
      %400 = sbr.rel (0) target = $region41
    $region40: #{tpu_custom_call.1} parent=1 // pred_region
      %s402 = ssub.s32 1024, 1024
      %403 = vsyncadd [#allocation4], %s402
      %s404 = sshll.u32 [#allocation10], 4
      %s405 = int_to_ptr.vmem [resolvable:$true] %s404
      %410 = dma.vmem_to_hbm [thread:$0]  %s405, 1024, %s4, [#allocation4], 128, 128, 8
    $region41: #{tpu_custom_call.1} parent=1 // pred_fallthru
      _
    // Predicated region
    $region42: #{tpu_custom_call.1} parent=1 // pred_check
      _
    $region43: #{tpu_custom_call.1} parent=1 // pred_check_branch
      %412 = sbr.rel (0) target = $region45
    $region44: #{tpu_custom_call.1} parent=1 // pred_region
      %413 = dma.done [#allocation4], 1024
    $region45: #{tpu_custom_call.1} parent=1 // pred_fallthru
      _
    %414 = vsyncpa [#allocation3], 1
    %415 = vsyncpa [#allocation6], 1
    %416 = vsyncpa [#allocation9], 1
    %417 = vsyncpa [#allocation4], 1

</llo_original>
